<compile_context>
chip_gen: v7x
topology: tpu7x:2x2x1
jax: 0.10.0
libtpu: 0.0.40
codegen_flags: <defaults>
</compile_context>

<pallas_src>
import jax
import jax.numpy as jnp
from jax.experimental import pallas as pl
from jax.experimental.pallas import tpu as pltpu


def _round_up(n, m=128):
    return ((n + m - 1) // m) * m


def _cdiv(a, b):
    return (a + b - 1) // b


# ----------------------------------------------------------------------------
# Fused kernel builder: all blocks of the net in one kernel body
# ----------------------------------------------------------------------------
def _make_deepnet_kernel(block_cfgs, mxu_dtype):
    n_lin = sum(1 for c in block_cfgs if c["has_linear"])
    n_blocks = len(block_cfgs)

    def kernel(*refs):
        # refs = [x, w1, b1, ..., wL, bL, out_1, ..., out_nblocks]
        x_ref = refs[0]
        wb = refs[1:1 + 2 * n_lin]
        outs = refs[1 + 2 * n_lin:1 + 2 * n_lin + n_blocks]

        h = x_ref[...].astype(jnp.float32)
        li = 0
        for bi, cfg in enumerate(block_cfgs):
            if cfg["has_linear"]:
                w_ref = wb[2 * li]
                b_ref = wb[2 * li + 1]
                li += 1
                # MXU matmul (optionally bf16 inputs), always f32 accumulate.
                h = jnp.dot(
                    h.astype(mxu_dtype),
                    w_ref[...].astype(mxu_dtype),
                    preferred_element_type=jnp.float32,
                )
                h = h + b_ref[...].astype(jnp.float32)
            act = cfg["activation"]
            if act == "relu":
                h = jnp.maximum(h, 0.0)          # VPU
            elif act == "tanh":
                h = jnp.tanh(h)                  # EUP, f32 math
            elif act is not None:
                raise ValueError(f"unsupported activation: {act}")
            # dropout in eval mode is identity (no-op).
            outs[bi][...] = h.astype(outs[bi].dtype)

    return kernel


# ----------------------------------------------------------------------------
# Parameter construction (mirrors torch.nn.Linear shapes; weight stored as
# [in_features, out_features] so the kernel does y = x @ W + b)
# ----------------------------------------------------------------------------
def init_deepnet_params(key, blocks_config, input_features):
    params = []
    in_features = input_features
    features = [input_features]
    for cfg in blocks_config:
        out_features = in_features
        block_params = {"config": cfg}
        if "features" in cfg:
            out_features = cfg["features"]
            key, wk, bk = jax.random.split(key, 3)
            bound = 1.0 / jnp.sqrt(in_features)
            block_params["w"] = jax.random.uniform(
                wk, (in_features, out_features), jnp.float32, -bound, bound
            )
            block_params["b"] = jax.random.uniform(
                bk, (out_features,), jnp.float32, -bound, bound
            )
        features.append(out_features)
        in_features = out_features
        params.append(block_params)
    return params, features


# ----------------------------------------------------------------------------
# Fused forward: matches DeepNet.forward -> [inputs, block1_out, block2_out, ...]
# ----------------------------------------------------------------------------
def deepnet_forward(params, inputs, *, batch_tile=128, mxu_dtype=jnp.float32):
    B, in_features = inputs.shape
    dtype = inputs.dtype

    # ---- static block descriptions + lane-padded parameters ---------------
    block_cfgs = []
    padded_wb = []
    wb_specs = []
    flops = 0
    transc = 0
    nbytes = 0

    in_f = in_features
    for blk in params:
        cfg = blk["config"]
        has_linear = "w" in blk
        out_f = blk["w"].shape[1] if has_linear else in_f
        p_in, p_out = _round_up(in_f), _round_up(out_f)
        if has_linear:
            w_pad = jnp.zeros((p_in, p_out), dtype).at[:in_f, :out_f].set(blk["w"])
            b_pad = jnp.zeros((1, p_out), dtype).at[0, :out_f].set(blk["b"])
            padded_wb += [w_pad, b_pad]
            wb_specs += [
                pl.BlockSpec((p_in, p_out), lambda i: (0, 0)),   # resident weight
                pl.BlockSpec((1, p_out), lambda i: (0, 0)),      # resident bias
            ]
            nbytes += w_pad.size * 4 + b_pad.size * 4
        block_cfgs.append(
            {
                "has_linear": has_linear,
                "activation": cfg.get("activation", None),
                "p_in": p_in,
                "p_out": p_out,
                "out": out_f,
            }
        )
        in_f = out_f

    # ---- pad input: lane-dense features, batch to a tile multiple ---------
    p_in0 = _round_up(in_features)
    tb = batch_tile
    assert tb % 8 == 0, "batch_tile must be a multiple of 8 (sublane)"
    b_rows = _cdiv(B, tb) * tb
    x_pad = jnp.zeros((b_rows, p_in0), dtype).at[:B, :in_features].set(inputs)

    grid = (b_rows // tb,)
    in_specs = [pl.BlockSpec((tb, p_in0), lambda i: (i, 0))] + wb_specs
    out_shapes = tuple(
        jax.ShapeDtypeStruct((b_rows, c["p_out"]), dtype) for c in block_cfgs
    )
    out_specs = [
        pl.BlockSpec((tb, c["p_out"]), lambda i: (i, 0)) for c in block_cfgs
    ]

    nbytes += x_pad.size * 4 + sum(b_rows * c["p_out"] * 4 for c in block_cfgs)
    for c in block_cfgs:
        if c["has_linear"]:
            flops += 2 * b_rows * c["p_in"] * c["p_out"]
        if c["activation"] == "tanh":
            transc += b_rows * c["p_out"]

    fused = pl.pallas_call(
        _make_deepnet_kernel(block_cfgs, mxu_dtype),
        out_shape=out_shapes,
        grid_spec=pltpu.PrefetchScalarGridSpec(
            num_scalar_prefetch=0,
            grid=grid,
            in_specs=in_specs,
            out_specs=out_specs,
        ),
        compiler_params=pltpu.CompilerParams(
            dimension_semantics=("parallel",),
        ),
        cost_estimate=pl.CostEstimate(
            flops=flops, transcendentals=transc, bytes_accessed=nbytes
        ),
    )

    padded_outs = fused(x_pad, *padded_wb)

    # Slice away batch/lane padding; prepend the raw input (DeepNet semantics).
    layer_outputs = [inputs]
    for o, c in zip(padded_outs, block_cfgs):
        layer_outputs.append(o[:B, : c["out"]])
    return layer_outputs


# ----------------------------------------------------------------------------
# Reference (plain JAX) for sanity check
# ----------------------------------------------------------------------------
def deepnet_forward_ref(params, inputs):
    layer_outputs = [inputs]
    x = inputs
    for blk in params:
        cfg = blk["config"]
        if "w" in blk:
            x = x @ blk["w"] + blk["b"]
        act = cfg.get("activation", None)
        if act == "relu":
            x = jnp.maximum(x, 0.0)
        elif act == "tanh":
            x = jnp.tanh(x)
        layer_outputs.append(x)
    return layer_outputs


if __name__ == "__main__":
    # Concrete instantiation of DeepNet(blocks_config, input_features=32)
    blocks_config = [
        {"features": 64, "activation": "relu", "dropout": 0.1},
        {"features": 32, "activation": "tanh"},
        {"features": 16},
    ]
    input_features = 32
    batch = 256  # small, but enough for 2 grid steps of 128 rows

    key = jax.random.PRNGKey(0)
    key, pkey, xkey = jax.random.split(key, 3)
    params, features = init_deepnet_params(pkey, blocks_config, input_features)
    x = jax.random.normal(xkey, (batch, input_features), jnp.float32)

    # ---- f32 MXU path: exact check vs reference ---------------------------
    outs = deepnet_forward(params, x, batch_tile=128, mxu_dtype=jnp.float32)
    outs = [jax.block_until_ready(o) for o in outs]
    refs = deepnet_forward_ref(params, x)

    assert features == [32, 64, 32, 16]
    assert len(outs) == len(blocks_config) + 1
    for o, r, f in zip(outs, refs, features):
        assert o.shape == (batch, f), (o.shape, f)
        assert jnp.allclose(o, r, atol=1e-5, rtol=1e-5), float(
            jnp.max(jnp.abs(o - r))
        )

    # ---- bf16-MXU path (v6e/v7x throughput mode), f32 accumulate ----------
    outs_bf16 = deepnet_forward(params, x, batch_tile=128, mxu_dtype=jnp.bfloat16)
    outs_bf16 = [jax.block_until_ready(o) for o in outs_bf16]
    for o, r in zip(outs_bf16, refs):
        assert jnp.allclose(o, r, atol=5e-2, rtol=5e-2), float(
            jnp.max(jnp.abs(o - r))
        )

    print("KERNEL_OK")
</pallas_src>

<mosaic_0001>
module attributes {stable_mosaic.version = 11 : i64} {
  func.func @kernel(%arg0: i32, %arg1: memref<128x128xf32, #tpu.memory_space<vmem>>, %arg2: memref<128x128xf32, #tpu.memory_space<vmem>>, %arg3: memref<1x128xf32, #tpu.memory_space<vmem>>, %arg4: memref<128x128xf32, #tpu.memory_space<vmem>>, %arg5: memref<1x128xf32, #tpu.memory_space<vmem>>, %arg6: memref<128x128xf32, #tpu.memory_space<vmem>>, %arg7: memref<1x128xf32, #tpu.memory_space<vmem>>, %arg8: memref<128x128xf32, #tpu.memory_space<vmem>>, %arg9: memref<128x128xf32, #tpu.memory_space<vmem>>, %arg10: memref<128x128xf32, #tpu.memory_space<vmem>>) attributes {dimension_semantics = [#tpu.dimension_semantics<parallel>], iteration_bounds = array<i64: 2>, scalar_prefetch = 0 : i64, scratch_operands = 0 : i64, tpu.core_type = #tpu.core_type<tc>, window_params = [{transform_indices = @transform_0, window_bounds = array<i64: 128, 128>}, {pipeline_mode = #tpu.pipeline_mode<synchronous>, transform_indices = @transform_1, window_bounds = array<i64: 128, 128>}, {pipeline_mode = #tpu.pipeline_mode<synchronous>, transform_indices = @transform_2, window_bounds = array<i64: 1, 128>}, {pipeline_mode = #tpu.pipeline_mode<synchronous>, transform_indices = @transform_3, window_bounds = array<i64: 128, 128>}, {pipeline_mode = #tpu.pipeline_mode<synchronous>, transform_indices = @transform_4, window_bounds = array<i64: 1, 128>}, {pipeline_mode = #tpu.pipeline_mode<synchronous>, transform_indices = @transform_5, window_bounds = array<i64: 128, 128>}, {pipeline_mode = #tpu.pipeline_mode<synchronous>, transform_indices = @transform_6, window_bounds = array<i64: 1, 128>}, {transform_indices = @transform_7, window_bounds = array<i64: 128, 128>}, {transform_indices = @transform_8, window_bounds = array<i64: 128, 128>}, {transform_indices = @transform_9, window_bounds = array<i64: 128, 128>}]} {
    %c0 = arith.constant 0 : index
    %c0_0 = arith.constant 0 : index
    %0 = vector.load %arg1[%c0, %c0_0] : memref<128x128xf32, #tpu.memory_space<vmem>>, vector<128x128xf32>
    %c0_1 = arith.constant 0 : index
    %c0_2 = arith.constant 0 : index
    %1 = vector.load %arg2[%c0_1, %c0_2] : memref<128x128xf32, #tpu.memory_space<vmem>>, vector<128x128xf32>
    %cst = arith.constant dense<0.000000e+00> : vector<128x128xf32>
    %2 = tpu.matmul %0, %1, %cst {dimension_numbers = #tpu.dot_dimension_numbers<[1], [0], [0], [1], [0, 0, 1, 1], [], []>} : vector<128x128xf32>, vector<128x128xf32>, vector<128x128xf32> -> vector<128x128xf32>
    %c0_3 = arith.constant 0 : index
    %c0_4 = arith.constant 0 : index
    %3 = vector.load %arg3[%c0_3, %c0_4] : memref<1x128xf32, #tpu.memory_space<vmem>>, vector<1x128xf32>
    %4 = vector.broadcast %3 : vector<1x128xf32> to vector<128x128xf32>
    %5 = arith.addf %2, %4 : vector<128x128xf32>
    %cst_5 = arith.constant 0.000000e+00 : f32
    %6 = vector.broadcast %cst_5 : f32 to vector<128x128xf32>
    %7 = arith.maximumf %5, %6 : vector<128x128xf32>
    %c0_6 = arith.constant 0 : index
    %c0_7 = arith.constant 0 : index
    %8 = vector.load %arg8[%c0_6, %c0_7] : memref<128x128xf32, #tpu.memory_space<vmem>>, vector<128x128xf32>
    tpu.vector_store %arg8[%c0_6, %c0_7], %7 {strides = array<i32>} : memref<128x128xf32, #tpu.memory_space<vmem>>, vector<128x128xf32>,
    %c0_8 = arith.constant 0 : index
    %c0_9 = arith.constant 0 : index
    %9 = vector.load %arg4[%c0_8, %c0_9] : memref<128x128xf32, #tpu.memory_space<vmem>>, vector<128x128xf32>
    %cst_10 = arith.constant dense<0.000000e+00> : vector<128x128xf32>
    %10 = tpu.matmul %7, %9, %cst_10 {dimension_numbers = #tpu.dot_dimension_numbers<[1], [0], [0], [1], [0, 0, 1, 1], [], []>} : vector<128x128xf32>, vector<128x128xf32>, vector<128x128xf32> -> vector<128x128xf32>
    %c0_11 = arith.constant 0 : index
    %c0_12 = arith.constant 0 : index
    %11 = vector.load %arg5[%c0_11, %c0_12] : memref<1x128xf32, #tpu.memory_space<vmem>>, vector<1x128xf32>
    %12 = vector.broadcast %11 : vector<1x128xf32> to vector<128x128xf32>
    %13 = arith.addf %10, %12 : vector<128x128xf32>
    %14 = math.tanh %13 : vector<128x128xf32>
    %c0_13 = arith.constant 0 : index
    %c0_14 = arith.constant 0 : index
    %15 = vector.load %arg9[%c0_13, %c0_14] : memref<128x128xf32, #tpu.memory_space<vmem>>, vector<128x128xf32>
    tpu.vector_store %arg9[%c0_13, %c0_14], %14 {strides = array<i32>} : memref<128x128xf32, #tpu.memory_space<vmem>>, vector<128x128xf32>,
    %c0_15 = arith.constant 0 : index
    %c0_16 = arith.constant 0 : index
    %16 = vector.load %arg6[%c0_15, %c0_16] : memref<128x128xf32, #tpu.memory_space<vmem>>, vector<128x128xf32>
    %cst_17 = arith.constant dense<0.000000e+00> : vector<128x128xf32>
    %17 = tpu.matmul %14, %16, %cst_17 {dimension_numbers = #tpu.dot_dimension_numbers<[1], [0], [0], [1], [0, 0, 1, 1], [], []>} : vector<128x128xf32>, vector<128x128xf32>, vector<128x128xf32> -> vector<128x128xf32>
    %c0_18 = arith.constant 0 : index
    %c0_19 = arith.constant 0 : index
    %18 = vector.load %arg7[%c0_18, %c0_19] : memref<1x128xf32, #tpu.memory_space<vmem>>, vector<1x128xf32>
    %19 = vector.broadcast %18 : vector<1x128xf32> to vector<128x128xf32>
    %20 = arith.addf %17, %19 : vector<128x128xf32>
    %c0_20 = arith.constant 0 : index
    %c0_21 = arith.constant 0 : index
    %21 = vector.load %arg10[%c0_20, %c0_21] : memref<128x128xf32, #tpu.memory_space<vmem>>, vector<128x128xf32>
    tpu.vector_store %arg10[%c0_20, %c0_21], %20 {strides = array<i32>} : memref<128x128xf32, #tpu.memory_space<vmem>>, vector<128x128xf32>,
    return
  }
  func.func @transform_0(%arg0: i32) -> (i32, i32) {
    %c0_i32 = arith.constant 0 : i32
    %c0_i32_0 = arith.constant 0 : i32
    return %arg0, %c0_i32 : i32, i32
  }
  func.func @transform_1(%arg0: i32) -> (i32, i32) {
    %c0_i32 = arith.constant 0 : i32
    %c0_i32_0 = arith.constant 0 : i32
    %c0_i32_1 = arith.constant 0 : i32
    return %c0_i32, %c0_i32_0 : i32, i32
  }
  func.func @transform_2(%arg0: i32) -> (i32, i32) {
    %c0_i32 = arith.constant 0 : i32
    %c0_i32_0 = arith.constant 0 : i32
    %c0_i32_1 = arith.constant 0 : i32
    return %c0_i32, %c0_i32_0 : i32, i32
  }
  func.func @transform_3(%arg0: i32) -> (i32, i32) {
    %c0_i32 = arith.constant 0 : i32
    %c0_i32_0 = arith.constant 0 : i32
    %c0_i32_1 = arith.constant 0 : i32
    return %c0_i32, %c0_i32_0 : i32, i32
  }
  func.func @transform_4(%arg0: i32) -> (i32, i32) {
    %c0_i32 = arith.constant 0 : i32
    %c0_i32_0 = arith.constant 0 : i32
    %c0_i32_1 = arith.constant 0 : i32
    return %c0_i32, %c0_i32_0 : i32, i32
  }
  func.func @transform_5(%arg0: i32) -> (i32, i32) {
    %c0_i32 = arith.constant 0 : i32
    %c0_i32_0 = arith.constant 0 : i32
    %c0_i32_1 = arith.constant 0 : i32
    return %c0_i32, %c0_i32_0 : i32, i32
  }
  func.func @transform_6(%arg0: i32) -> (i32, i32) {
    %c0_i32 = arith.constant 0 : i32
    %c0_i32_0 = arith.constant 0 : i32
    %c0_i32_1 = arith.constant 0 : i32
    return %c0_i32, %c0_i32_0 : i32, i32
  }
  func.func @transform_7(%arg0: i32) -> (i32, i32) {
    %c0_i32 = arith.constant 0 : i32
    %c0_i32_0 = arith.constant 0 : i32
    return %arg0, %c0_i32 : i32, i32
  }
  func.func @transform_8(%arg0: i32) -> (i32, i32) {
    %c0_i32 = arith.constant 0 : i32
    %c0_i32_0 = arith.constant 0 : i32
    return %arg0, %c0_i32 : i32, i32
  }
  func.func @transform_9(%arg0: i32) -> (i32, i32) {
    %c0_i32 = arith.constant 0 : i32
    %c0_i32_0 = arith.constant 0 : i32
    return %arg0, %c0_i32 : i32, i32
  }
}

</mosaic_0001>

<llo_original>
// kernel: tpu_custom_call.1
$region0: #{tpu_custom_call.1}
  #allocation0 [shape = 'u32[]', space=smem, size = 0x4, offset = 0x4, fixed_abs, tag = 'smem constant byte address 0x4 - core index']
  #allocation1 [shape = 'u32[144,128]{1,0:T(1,128)}', space=vmem, size = 0x12000, scoped, tag = 'internal scratch']
  %s0 = inlined_call_operand.hbm [shape: f32[256,128], index: 0, kind: input, shape index: {}]
  %s1 = inlined_call_operand.hbm [shape: f32[128,128], index: 1, kind: input, shape index: {}]
  %s2 = inlined_call_operand.vmem [shape: f32[1,128], index: 2, kind: input, shape index: {}]
  %s3 = inlined_call_operand.hbm [shape: f32[128,128], index: 3, kind: input, shape index: {}]
  %s4 = inlined_call_operand.vmem [shape: f32[1,128], index: 4, kind: input, shape index: {}]
  %s5 = inlined_call_operand.hbm [shape: f32[128,128], index: 5, kind: input, shape index: {}]
  %s6 = inlined_call_operand.vmem [shape: f32[1,128], index: 6, kind: input, shape index: {}]
  %s7 = inlined_call_operand.hbm [shape: f32[256,128], index: 7, kind: output, shape index: {0}]
  %s8 = inlined_call_operand.hbm [shape: f32[256,128], index: 8, kind: output, shape index: {1}]
  %s9 = inlined_call_operand.hbm [shape: f32[256,128], index: 9, kind: output, shape index: {2}]
  %10 = xla_tuple %s7, %s8, %s9
  %s11 = sld [smem:[#allocation0]]
  $region93: #{tpu_custom_call.1} parent=0
    _
  %s13 = ssub.s32 1, %s11
  %s14 = scalar_select 0, %s13, %s11
  $region1: #{tpu_custom_call.1} parent=0
    #allocation2 [shape = 'u8[131072]{0}', space=vmem, size = 0x20000, scoped, tag = 'input window, operand 0']
    #allocation3 [shape = 's32[2]{0}', space=sflag, size = 0x8, scoped, tag = 'scoped memory for tpu_custom_call.1']
    #allocation4 [shape = 's32[2]{0}', space=sflag, size = 0x8, scoped, tag = 'scoped memory for tpu_custom_call.1']
    #allocation5 [shape = 'u8[65536]{0}', space=vmem, size = 0x10000, scoped, tag = 'input window, operand 1, single buffered']
    #allocation6 [shape = 's32[1]{0}', space=sflag, size = 0x4, scoped, tag = 'scoped memory for tpu_custom_call.1']
    #allocation7 [shape = 'u8[65536]{0}', space=vmem, size = 0x10000, scoped, tag = 'input window, operand 3, single buffered']
    #allocation8 [shape = 'u8[65536]{0}', space=vmem, size = 0x10000, scoped, tag = 'input window, operand 5, single buffered']
    #allocation9 [shape = 's32[1]{0}', space=sflag, size = 0x4, scoped, tag = 'scoped memory for tpu_custom_call.1']
    #allocation10 [shape = 'u8[131072]{0}', space=vmem, size = 0x20000, scoped, tag = 'output window, operand 0']
    #allocation11 [shape = 'u8[131072]{0}', space=vmem, size = 0x20000, scoped, tag = 'output window, operand 1']
    #allocation12 [shape = 's32[2]{0}', space=sflag, size = 0x8, scoped, tag = 'scoped memory for tpu_custom_call.1']
    #allocation13 [shape = 'u8[131072]{0}', space=vmem, size = 0x20000, scoped, tag = 'output window, operand 2']
    %15 = vsyncpa [#allocation3], 0
    %s16 = scalar_lea.sflag [#allocation3], 1
    %17 = vsyncpa %s16, 0
    %18 = vsyncpa [#allocation6], 0
    %19 = vsyncpa [#allocation9], 0
    %20 = vsyncpa [#allocation4], 0
    %s21 = scalar_lea.sflag [#allocation4], 1
    %22 = vsyncpa %s21, 0
    %23 = vsyncpa [#allocation12], 0
    %s24 = scalar_lea.sflag [#allocation12], 1
    %25 = vsyncpa %s24, 0
    loop: start=0, step=1, limit=4
    $region2: #{tpu_custom_call.1} parent=1 // loop_pre_header
      _
    $region3: #{tpu_custom_call.1} parent=1 // loop_header
      %s27 = sphi 0, %s31
      %p28 = scmp.ge.s32.totalorder %s27, 4
      %s37 = sphi 0, %s39
      %s40 = sphi 0, %s37
      %s41 = sphi 0, %s40
      %s57 = sphi 0, %s41
      %s61 = sphi 0, %s61
      %s63 = sphi 0, %s61
      %s64 = sphi 0, %s63
      %s78 = sphi 0, %s64
      %s82 = sphi 0, %s82
      %s84 = sphi 0, %s82
      %s85 = sphi 0, %s84
      %s99 = sphi 0, %s85
      %s103 = sphi 0, %s103
      %s105 = sphi 0, %s103
      %s106 = sphi 0, %s105
      %s120 = sphi 0, %s106
      %s124 = sphi 0, %s124
      %s126 = sphi 0, %s124
      %s127 = sphi 0, %s126
      %s141 = sphi 0, %s127
      %s145 = sphi 0, %s145
      %s147 = sphi 0, %s145
      %s148 = sphi 0, %s147
      %s162 = sphi 0, %s148
      %s166 = sphi 0, %s166
      %s168 = sphi 0, %s166
      %s169 = sphi 0, %s168
      %s183 = sphi 0, %s169
      %s189 = sphi 0, %s191
      %s192 = sphi 0, %s189
      %s193 = sphi 0, %s192
      %s209 = sphi 0, %s193
      %s215 = sphi 0, %s217
      %s218 = sphi 0, %s215
      %s219 = sphi 0, %s218
      %s235 = sphi 0, %s219
      %s241 = sphi 0, %s243
      %s244 = sphi 0, %s241
      %s245 = sphi 0, %s244
      %s261 = sphi 0, %s245
    $region4: #{tpu_custom_call.1} parent=1 // loop_header_branch
      %30 = sbr.rel (%p28) target = $region8
    $region5: #{tpu_custom_call.1} parent=1 // loop_body
      %s32 = ssub.s32 %s27, 1
      %s33 = ssub.s32 %s27, 2
      %s34 = sadd.s32 %s27, 1
      %s35 = ssub.s32 %s27, %s34
      %p36 = scmp.eq.s32.totalorder %s35, 0
      %s38 = sadd.s32 %s37, 1
      %s39 = scalar_select %p36, %s37, %s38
      %p42 = pneg %p36
      %p43 = scmp.eq.s32.totalorder %s27, 1
      %p44 = por %p42, %p43
      %p45 = scmp.ne.s32.totalorder %s37, %s40
      %p46 = scmp.eq.s32.totalorder %s27, 0
      %p47 = por %p45, %p46
      %p48 = scmp.ne.s32.totalorder %s37, %s40
      %p49 = scmp.eq.s32.totalorder %s32, 1
      %p50 = por %p48, %p49
      %p51 = scmp.ne.s32.totalorder %s40, %s41
      %p52 = scmp.eq.s32.totalorder %s32, 0
      %p53 = por %p51, %p52
      %p54 = scmp.ne.s32.totalorder %s40, %s41
      %p55 = scmp.eq.s32.totalorder %s33, 1
      %p56 = por %p54, %p55
      %p58 = scmp.ne.s32.totalorder %s41, %s57
      %p59 = scmp.eq.s32.totalorder %s33, 0
      %p60 = por %p58, %p59
      %s62 = sadd.s32 %s61, 1
      %p65 = scmp.eq.s32.totalorder %s27, 1
      %p66 = scmp.ne.s32.totalorder %s61, %s63
      %p67 = scmp.eq.s32.totalorder %s27, 0
      %p68 = por %p66, %p67
      %p69 = scmp.ne.s32.totalorder %s61, %s63
      %p70 = scmp.eq.s32.totalorder %s32, 1
      %p71 = por %p69, %p70
      %p72 = scmp.ne.s32.totalorder %s63, %s64
      %p73 = scmp.eq.s32.totalorder %s32, 0
      %p74 = por %p72, %p73
      %p75 = scmp.ne.s32.totalorder %s63, %s64
      %p76 = scmp.eq.s32.totalorder %s33, 1
      %p77 = por %p75, %p76
      %p79 = scmp.ne.s32.totalorder %s64, %s78
      %p80 = scmp.eq.s32.totalorder %s33, 0
      %p81 = por %p79, %p80
      %s83 = sadd.s32 %s82, 1
      %p86 = scmp.eq.s32.totalorder %s27, 1
      %p87 = scmp.ne.s32.totalorder %s82, %s84
      %p88 = scmp.eq.s32.totalorder %s27, 0
      %p89 = por %p87, %p88
      %p90 = scmp.ne.s32.totalorder %s82, %s84
      %p91 = scmp.eq.s32.totalorder %s32, 1
      %p92 = por %p90, %p91
      %p93 = scmp.ne.s32.totalorder %s84, %s85
      %p94 = scmp.eq.s32.totalorder %s32, 0
      %p95 = por %p93, %p94
      %p96 = scmp.ne.s32.totalorder %s84, %s85
      %p97 = scmp.eq.s32.totalorder %s33, 1
      %p98 = por %p96, %p97
      %p100 = scmp.ne.s32.totalorder %s85, %s99
      %p101 = scmp.eq.s32.totalorder %s33, 0
      %p102 = por %p100, %p101
      %s104 = sadd.s32 %s103, 1
      %p107 = scmp.eq.s32.totalorder %s27, 1
      %p108 = scmp.ne.s32.totalorder %s103, %s105
      %p109 = scmp.eq.s32.totalorder %s27, 0
      %p110 = por %p108, %p109
      %p111 = scmp.ne.s32.totalorder %s103, %s105
      %p112 = scmp.eq.s32.totalorder %s32, 1
      %p113 = por %p111, %p112
      %p114 = scmp.ne.s32.totalorder %s105, %s106
      %p115 = scmp.eq.s32.totalorder %s32, 0
      %p116 = por %p114, %p115
      %p117 = scmp.ne.s32.totalorder %s105, %s106
      %p118 = scmp.eq.s32.totalorder %s33, 1
      %p119 = por %p117, %p118
      %p121 = scmp.ne.s32.totalorder %s106, %s120
      %p122 = scmp.eq.s32.totalorder %s33, 0
      %p123 = por %p121, %p122
      %s125 = sadd.s32 %s124, 1
      %p128 = scmp.eq.s32.totalorder %s27, 1
      %p129 = scmp.ne.s32.totalorder %s124, %s126
      %p130 = scmp.eq.s32.totalorder %s27, 0
      %p131 = por %p129, %p130
      %p132 = scmp.ne.s32.totalorder %s124, %s126
      %p133 = scmp.eq.s32.totalorder %s32, 1
      %p134 = por %p132, %p133
      %p135 = scmp.ne.s32.totalorder %s126, %s127
      %p136 = scmp.eq.s32.totalorder %s32, 0
      %p137 = por %p135, %p136
      %p138 = scmp.ne.s32.totalorder %s126, %s127
      %p139 = scmp.eq.s32.totalorder %s33, 1
      %p140 = por %p138, %p139
      %p142 = scmp.ne.s32.totalorder %s127, %s141
      %p143 = scmp.eq.s32.totalorder %s33, 0
      %p144 = por %p142, %p143
      %s146 = sadd.s32 %s145, 1
      %p149 = scmp.eq.s32.totalorder %s27, 1
      %p150 = scmp.ne.s32.totalorder %s145, %s147
      %p151 = scmp.eq.s32.totalorder %s27, 0
      %p152 = por %p150, %p151
      %p153 = scmp.ne.s32.totalorder %s145, %s147
      %p154 = scmp.eq.s32.totalorder %s32, 1
      %p155 = por %p153, %p154
      %p156 = scmp.ne.s32.totalorder %s147, %s148
      %p157 = scmp.eq.s32.totalorder %s32, 0
      %p158 = por %p156, %p157
      %p159 = scmp.ne.s32.totalorder %s147, %s148
      %p160 = scmp.eq.s32.totalorder %s33, 1
      %p161 = por %p159, %p160
      %p163 = scmp.ne.s32.totalorder %s148, %s162
      %p164 = scmp.eq.s32.totalorder %s33, 0
      %p165 = por %p163, %p164
      %s167 = sadd.s32 %s166, 1
      %p170 = scmp.eq.s32.totalorder %s27, 1
      %p171 = scmp.ne.s32.totalorder %s166, %s168
      %p172 = scmp.eq.s32.totalorder %s27, 0
      %p173 = por %p171, %p172
      %p174 = scmp.ne.s32.totalorder %s166, %s168
      %p175 = scmp.eq.s32.totalorder %s32, 1
      %p176 = por %p174, %p175
      %p177 = scmp.ne.s32.totalorder %s168, %s169
      %p178 = scmp.eq.s32.totalorder %s32, 0
      %p179 = por %p177, %p178
      %p180 = scmp.ne.s32.totalorder %s168, %s169
      %p181 = scmp.eq.s32.totalorder %s33, 1
      %p182 = por %p180, %p181
      %p184 = scmp.ne.s32.totalorder %s169, %s183
      %p185 = scmp.eq.s32.totalorder %s33, 0
      %p186 = por %p184, %p185
      %s187 = ssub.s32 %s27, %s34
      %p188 = scmp.eq.s32.totalorder %s187, 0
      %s190 = sadd.s32 %s189, 1
      %s191 = scalar_select %p188, %s189, %s190
      %p194 = pneg %p188
      %p195 = scmp.eq.s32.totalorder %s27, 1
      %p196 = por %p194, %p195
      %p197 = scmp.ne.s32.totalorder %s189, %s192
      %p198 = scmp.eq.s32.totalorder %s27, 0
      %p199 = por %p197, %p198
      %p200 = scmp.ne.s32.totalorder %s189, %s192
      %p201 = scmp.eq.s32.totalorder %s32, 1
      %p202 = por %p200, %p201
      %p203 = scmp.ne.s32.totalorder %s192, %s193
      %p204 = scmp.eq.s32.totalorder %s32, 0
      %p205 = por %p203, %p204
      %p206 = scmp.ne.s32.totalorder %s192, %s193
      %p207 = scmp.eq.s32.totalorder %s33, 1
      %p208 = por %p206, %p207
      %p210 = scmp.ne.s32.totalorder %s193, %s209
      %p211 = scmp.eq.s32.totalorder %s33, 0
      %p212 = por %p210, %p211
      %s213 = ssub.s32 %s27, %s34
      %p214 = scmp.eq.s32.totalorder %s213, 0
      %s216 = sadd.s32 %s215, 1
      %s217 = scalar_select %p214, %s215, %s216
      %p220 = pneg %p214
      %p221 = scmp.eq.s32.totalorder %s27, 1
      %p222 = por %p220, %p221
      %p223 = scmp.ne.s32.totalorder %s215, %s218
      %p224 = scmp.eq.s32.totalorder %s27, 0
      %p225 = por %p223, %p224
      %p226 = scmp.ne.s32.totalorder %s215, %s218
      %p227 = scmp.eq.s32.totalorder %s32, 1
      %p228 = por %p226, %p227
      %p229 = scmp.ne.s32.totalorder %s218, %s219
      %p230 = scmp.eq.s32.totalorder %s32, 0
      %p231 = por %p229, %p230
      %p232 = scmp.ne.s32.totalorder %s218, %s219
      %p233 = scmp.eq.s32.totalorder %s33, 1
      %p234 = por %p232, %p233
      %p236 = scmp.ne.s32.totalorder %s219, %s235
      %p237 = scmp.eq.s32.totalorder %s33, 0
      %p238 = por %p236, %p237
      %s239 = ssub.s32 %s27, %s34
      %p240 = scmp.eq.s32.totalorder %s239, 0
      %s242 = sadd.s32 %s241, 1
      %s243 = scalar_select %p240, %s241, %s242
      %p246 = pneg %p240
      %p247 = scmp.eq.s32.totalorder %s27, 1
      %p248 = por %p246, %p247
      %p249 = scmp.ne.s32.totalorder %s241, %s244
      %p250 = scmp.eq.s32.totalorder %s27, 0
      %p251 = por %p249, %p250
      %p252 = scmp.ne.s32.totalorder %s241, %s244
      %p253 = scmp.eq.s32.totalorder %s32, 1
      %p254 = por %p252, %p253
      %p255 = scmp.ne.s32.totalorder %s244, %s245
      %p256 = scmp.eq.s32.totalorder %s32, 0
      %p257 = por %p255, %p256
      %p258 = scmp.ne.s32.totalorder %s244, %s245
      %p259 = scmp.eq.s32.totalorder %s33, 1
      %p260 = por %p258, %p259
      %p262 = scmp.ne.s32.totalorder %s245, %s261
      %p263 = scmp.eq.s32.totalorder %s33, 0
      %p264 = por %p262, %p263
      %p265 = scmp.le.s32.totalorder 1, %s27
      %p266 = scmp.lt.s32.totalorder %s27, 3
      %p267 = pnand %p265, %p266
      %p268 = pneg %p267
      // Predicated region
      $region9: #{tpu_custom_call.1} parent=5 // pred_check
        _
      $region10: #{tpu_custom_call.1} parent=5 // pred_check_branch
        %270 = sbr.rel (%p267) target = $region12
      $region11: #{tpu_custom_call.1} parent=5 // pred_region
        %s271 = ssub.s32 %s27, 1
        // Predicated region
        $region13: #{tpu_custom_call.1} parent=11 // pred_check
          %p272 = pneg %p74
        $region14: #{tpu_custom_call.1} parent=11 // pred_check_branch
          %274 = sbr.rel (%p272) target = $region16
        $region15: #{tpu_custom_call.1} parent=11 // pred_region
          %s276 = ssub.s32 2048, 2048
          %277 = vsyncadd [#allocation6], %s276
          %s278 = sshll.u32 [#allocation5], 4
          %s279 = int_to_ptr.vmem [resolvable:$true] %s278
          %284 = dma.hbm_to_vmem [thread:$0]  %s1, 2048, %s279, [#allocation6], 128, 128, 8
        $region16: #{tpu_custom_call.1} parent=11 // pred_fallthru
          _
        // Predicated region
        $region17: #{tpu_custom_call.1} parent=11 // pred_check
          %p285 = pneg %p95
        $region18: #{tpu_custom_call.1} parent=11 // pred_check_branch
          %287 = sbr.rel (%p285) target = $region20
        $region19: #{tpu_custom_call.1} parent=11 // pred_region
          _
        $region20: #{tpu_custom_call.1} parent=11 // pred_fallthru
          _
        // Predicated region
        $region21: #{tpu_custom_call.1} parent=11 // pred_check
          %p288 = pneg %p116
        $region22: #{tpu_custom_call.1} parent=11 // pred_check_branch
          %290 = sbr.rel (%p288) target = $region24
        $region23: #{tpu_custom_call.1} parent=11 // pred_region
          %s292 = ssub.s32 2048, 2048
          %293 = vsyncadd [#allocation6], %s292
          %s294 = sshll.u32 [#allocation7], 4
          %s295 = int_to_ptr.vmem [resolvable:$true] %s294
          %300 = dma.hbm_to_vmem [thread:$0]  %s3, 2048, %s295, [#allocation6], 128, 128, 8
        $region24: #{tpu_custom_call.1} parent=11 // pred_fallthru
          _
        // Predicated region
        $region25: #{tpu_custom_call.1} parent=11 // pred_check
          %p301 = pneg %p137
        $region26: #{tpu_custom_call.1} parent=11 // pred_check_branch
          %303 = sbr.rel (%p301) target = $region28
        $region27: #{tpu_custom_call.1} parent=11 // pred_region
          _
        $region28: #{tpu_custom_call.1} parent=11 // pred_fallthru
          _
        // Predicated region
        $region29: #{tpu_custom_call.1} parent=11 // pred_check
          %p304 = pneg %p158
        $region30: #{tpu_custom_call.1} parent=11 // pred_check_branch
          %306 = sbr.rel (%p304) target = $region32
        $region31: #{tpu_custom_call.1} parent=11 // pred_region
          %s308 = ssub.s32 2048, 2048
          %309 = vsyncadd [#allocation9], %s308
          %s310 = sshll.u32 [#allocation8], 4
          %s311 = int_to_ptr.vmem [resolvable:$true] %s310
          %316 = dma.hbm_to_vmem [thread:$0]  %s5, 2048, %s311, [#allocation9], 128, 128, 8
        $region32: #{tpu_custom_call.1} parent=11 // pred_fallthru
          _
        // Predicated region
        $region33: #{tpu_custom_call.1} parent=11 // pred_check
          %p317 = pneg %p179
        $region34: #{tpu_custom_call.1} parent=11 // pred_check_branch
          %319 = sbr.rel (%p317) target = $region36
        $region35: #{tpu_custom_call.1} parent=11 // pred_region
          _
        $region36: #{tpu_custom_call.1} parent=11 // pred_fallthru
          _
      $region12: #{tpu_custom_call.1} parent=5 // pred_fallthru
        _
      %p320 = scmp.lt.s32.totalorder %s27, 2
      // Predicated region
      $region37: #{tpu_custom_call.1} parent=5 // pred_check
        %p321 = pneg %p320
      $region38: #{tpu_custom_call.1} parent=5 // pred_check_branch
        %323 = sbr.rel (%p321) target = $region40
      $region39: #{tpu_custom_call.1} parent=5 // pred_region
        // Predicated region
        $region41: #{tpu_custom_call.1} parent=39 // pred_check
          %p324 = pneg %p47
        $region42: #{tpu_custom_call.1} parent=39 // pred_check_branch
          %326 = sbr.rel (%p324) target = $region44
        $region43: #{tpu_custom_call.1} parent=39 // pred_region
          %s327 = sand.u32 %s37, 1
          %s328 = scalar_lea.sflag [#allocation3], %s327
          %s329 = sand.u32 %s37, 1
          %s330 = smul.addr %s329, 128
          %s331 = scalar_lea.vmem [#allocation2], %s330
          %s332 = smul.u32 16, %s27
          %s334 = ssub.s32 2048, 2048
          %335 = vsyncadd %s328, %s334
          %s336 = smul.addr %s332, 128
          %s337 = scalar_lea.hbm %s0, %s336
          %s338 = sshll.u32 %s331, 4
          %s339 = int_to_ptr.vmem [resolvable:$true] %s338
          %344 = dma.hbm_to_vmem [thread:$0]  %s337, 2048, %s339, %s328, 128, 128, 8
        $region44: #{tpu_custom_call.1} parent=39 // pred_fallthru
          _
      $region40: #{tpu_custom_call.1} parent=5 // pred_fallthru
        _
      %p345 = scmp.le.s32.totalorder 1, %s27
      %p346 = scmp.lt.s32.totalorder %s27, 3
      %p347 = pnand %p345, %p346
      %p348 = pneg %p347
      // Predicated region
      $region45: #{tpu_custom_call.1} parent=5 // pred_check
        _
      $region46: #{tpu_custom_call.1} parent=5 // pred_check_branch
        %350 = sbr.rel (%p347) target = $region48
      $region47: #{tpu_custom_call.1} parent=5 // pred_region
        %s351 = ssub.s32 %s27, 1
        %s352 = sand.u32 %s40, 1
        %s353 = scalar_lea.sflag [#allocation3], %s352
        %s354 = sand.u32 %s40, 1
        %s355 = smul.addr %s354, 128
        %s356 = scalar_lea.vmem [#allocation2], %s355
        // Predicated region
        $region49: #{tpu_custom_call.1} parent=47 // pred_check
          %p357 = pneg %p53
        $region50: #{tpu_custom_call.1} parent=47 // pred_check_branch
          %359 = sbr.rel (%p357) target = $region52
        $region51: #{tpu_custom_call.1} parent=47 // pred_region
          %360 = dma.done %s353, 2048
        $region52: #{tpu_custom_call.1} parent=47 // pred_fallthru
          _
        // Predicated region
        $region53: #{tpu_custom_call.1} parent=47 // pred_check
          %p361 = pneg %p74
        $region54: #{tpu_custom_call.1} parent=47 // pred_check_branch
          %363 = sbr.rel (%p361) target = $region56
        $region55: #{tpu_custom_call.1} parent=47 // pred_region
          %364 = dma.done [#allocation6], 2048
        $region56: #{tpu_custom_call.1} parent=47 // pred_fallthru
          _
        // Predicated region
        $region57: #{tpu_custom_call.1} parent=47 // pred_check
          %p365 = pneg %p116
        $region58: #{tpu_custom_call.1} parent=47 // pred_check_branch
          %367 = sbr.rel (%p365) target = $region60
        $region59: #{tpu_custom_call.1} parent=47 // pred_region
          %368 = dma.done [#allocation6], 2048
        $region60: #{tpu_custom_call.1} parent=47 // pred_fallthru
          _
        // Predicated region
        $region61: #{tpu_custom_call.1} parent=47 // pred_check
          %p369 = pneg %p158
        $region62: #{tpu_custom_call.1} parent=47 // pred_check_branch
          %371 = sbr.rel (%p369) target = $region64
        $region63: #{tpu_custom_call.1} parent=47 // pred_region
          %372 = dma.done [#allocation9], 2048
        $region64: #{tpu_custom_call.1} parent=47 // pred_fallthru
          _
        %s373 = sand.u32 %s40, 1
        %s374 = scalar_lea.sflag [#allocation3], %s373
        %s375 = sand.u32 %s40, 1
        %s376 = smul.addr %s375, 128
        %s377 = scalar_lea.vmem [#allocation2], %s376
        %p378 = pneg %p53
        %p379 = pneg %p50
        %p380 = pneg %p74
        %p381 = pneg %p71
        %p382 = pneg %p95
        %p383 = pneg %p92
        %p384 = pneg %p116
        %p385 = pneg %p113
        %p386 = pneg %p137
        %p387 = pneg %p134
        %p388 = pneg %p158
        %p389 = pneg %p155
        %p390 = pneg %p179
        %p391 = pneg %p176
        %p392 = pneg %p205
        %p393 = pneg %p202
        %s394 = sand.u32 %s192, 1
        %s395 = scalar_lea.sflag [#allocation4], %s394
        %s396 = sand.u32 %s192, 1
        %s397 = smul.addr %s396, 128
        %s398 = scalar_lea.vmem [#allocation10], %s397
        %p399 = pneg %p231
        %p400 = pneg %p228
        %s401 = sand.u32 %s32, 1
        %s402 = scalar_lea.sflag [#allocation12], %s401
        %s403 = sand.u32 %s218, 1
        %s404 = smul.addr %s403, 128
        %s405 = scalar_lea.vmem [#allocation11], %s404
        %p406 = pneg %p257
        %p407 = pneg %p254
        %s408 = sand.u32 %s32, 1
        %s409 = scalar_lea.sflag [#allocation12], %s408
        %s410 = sand.u32 %s244, 1
        %s411 = smul.addr %s410, 128
        %s412 = scalar_lea.vmem [#allocation13], %s411
        %s413 = smul.u32 16, %s32
        %s414 = smul.u32 16, %s32
        %s415 = smul.u32 16, %s32
        %s416 = smul.u32 16, %s32
        %v417 = vld [vmem:[%s356] sm:$0xff]
        %v418 = vld [vmem:[%s356 + $0x8] sm:$0xff]
        %v419 = vld [vmem:[%s356 + $0x10] sm:$0xff]
        %v420 = vld [vmem:[%s356 + $0x18] sm:$0xff]
        %v421 = vld [vmem:[%s356 + $0x20] sm:$0xff]
        %v422 = vld [vmem:[%s356 + $0x28] sm:$0xff]
        %v423 = vld [vmem:[%s356 + $0x30] sm:$0xff]
        %v424 = vld [vmem:[%s356 + $0x38] sm:$0xff]
        %v425 = vld [vmem:[%s356 + $0x40] sm:$0xff]
        %v426 = vld [vmem:[%s356 + $0x48] sm:$0xff]
        %v427 = vld [vmem:[%s356 + $0x50] sm:$0xff]
        %v428 = vld [vmem:[%s356 + $0x58] sm:$0xff]
        %v429 = vld [vmem:[%s356 + $0x60] sm:$0xff]
        %v430 = vld [vmem:[%s356 + $0x68] sm:$0xff]
        %v431 = vld [vmem:[%s356 + $0x70] sm:$0xff]
        %v432 = vld [vmem:[%s356 + $0x78] sm:$0xff]
        %v433 = vld [vmem:[#allocation5] sm:$0xff]
        %v434 = vld [vmem:[#allocation5 + $0x8] sm:$0xff]
        %v435 = vld [vmem:[#allocation5 + $0x10] sm:$0xff]
        %v436 = vld [vmem:[#allocation5 + $0x18] sm:$0xff]
        %v437 = vld [vmem:[#allocation5 + $0x20] sm:$0xff]
        %v438 = vld [vmem:[#allocation5 + $0x28] sm:$0xff]
        %v439 = vld [vmem:[#allocation5 + $0x30] sm:$0xff]
        %v440 = vld [vmem:[#allocation5 + $0x38] sm:$0xff]
        %v441 = vld [vmem:[#allocation5 + $0x40] sm:$0xff]
        %v442 = vld [vmem:[#allocation5 + $0x48] sm:$0xff]
        %v443 = vld [vmem:[#allocation5 + $0x50] sm:$0xff]
        %v444 = vld [vmem:[#allocation5 + $0x58] sm:$0xff]
        %v445 = vld [vmem:[#allocation5 + $0x60] sm:$0xff]
        %v446 = vld [vmem:[#allocation5 + $0x68] sm:$0xff]
        %v447 = vld [vmem:[#allocation5 + $0x70] sm:$0xff]
        %v448 = vld [vmem:[#allocation5 + $0x78] sm:$0xff]
        %v449 = vld [vmem:[%s2] sm:$0x1]
        %v451 = vlaneseq
        %v452 = vshrl.u32 %v451, 7
        %v453 = vsub.s32 0, %v452
        %v454 = vrot.slane %v449, %v453
        %456 = vmatprep.subr.mxu0 0.0
        %457 = vmatpush1.msra.mxu0 %v433
        %458 = vmatprep.subr.mxu0 0.0
        %459 = vmatpush1.msra.mxu0 %v434
        %460 = vmatprep.subr.mxu0 0.0
        %461 = vmatpush1.msra.mxu0 %v435
        %462 = vmatprep.subr.mxu0 0.0
        %463 = vmatpush1.msra.mxu0 %v436
        %464 = vmatprep.subr.mxu0 0.0
        %465 = vmatpush1.msra.mxu0 %v437
        %466 = vmatprep.subr.mxu0 0.0
        %467 = vmatpush1.msra.mxu0 %v438
        %468 = vmatprep.subr.mxu0 0.0
        %469 = vmatpush1.msra.mxu0 %v439
        %470 = vmatprep.subr.mxu0 0.0
        %471 = vmatpush1.msra.mxu0 %v440
        %472 = vmatprep.subr.mxu0 0.0
        %473 = vmatpush1.msra.mxu0 %v441
        %474 = vmatprep.subr.mxu0 0.0
        %475 = vmatpush1.msra.mxu0 %v442
        %476 = vmatprep.subr.mxu0 0.0
        %477 = vmatpush1.msra.mxu0 %v443
        %478 = vmatprep.subr.mxu0 0.0
        %479 = vmatpush1.msra.mxu0 %v444
        %480 = vmatprep.subr.mxu0 0.0
        %481 = vmatpush1.msra.mxu0 %v445
        %482 = vmatprep.subr.mxu0 0.0
        %483 = vmatpush1.msra.mxu0 %v446
        %484 = vmatprep.subr.mxu0 0.0
        %485 = vmatpush1.msra.mxu0 %v447
        %486 = vmatprep.subr.mxu0 0.0
        %487 = vmatpush1.msra.mxu0 %v448
        %488 = vmatprep.subr.mxu0 0.0
        %489 = vmatpush1.msra.mxu0 0.0
        %490 = vmatprep.subr.mxu0 0.0
        %491 = vmatpush1.msra.mxu0 0.0
        %492 = vmatprep.subr.mxu0 0.0
        %493 = vmatpush1.msra.mxu0 0.0
        %494 = vmatprep.subr.mxu0 0.0
        %495 = vmatpush1.msra.mxu0 0.0
        %496 = vmatprep.subr.mxu0 0.0
        %497 = vmatpush1.msra.mxu0 0.0
        %498 = vmatprep.subr.mxu0 0.0
        %499 = vmatpush1.msra.mxu0 0.0
        %500 = vmatprep.subr.mxu0 0.0
        %501 = vmatpush1.msra.mxu0 0.0
        %502 = vmatprep.subr.mxu0 0.0
        %503 = vmatpush1.msra.mxu0 0.0
        %504 = vmatprep.subr.mxu0 0.0
        %505 = vmatpush1.msra.mxu0 0.0
        %506 = vmatprep.subr.mxu0 0.0
        %507 = vmatpush1.msra.mxu0 0.0
        %508 = vmatprep.subr.mxu0 0.0
        %509 = vmatpush1.msra.mxu0 0.0
        %510 = vmatprep.subr.mxu0 0.0
        %511 = vmatpush1.msra.mxu0 0.0
        %512 = vmatprep.subr.mxu0 0.0
        %513 = vmatpush1.msra.mxu0 0.0
        %514 = vmatprep.subr.mxu0 0.0
        %515 = vmatpush1.msra.mxu0 0.0
        %516 = vmatprep.subr.mxu0 0.0
        %517 = vmatpush1.msra.mxu0 0.0
        %518 = vmatprep.subr.mxu0 0.0
        %519 = vmatpush1.msra.mxu0 0.0
        %520 = vmatprep.mubr.f32.mxu0 0.0
        %521 = vmatmul.mubr.f32.gmra.mrb[0].mxu0 %v417
        %v522 = vpop.f32.mrb[0].mxu0
        %v523 = vadd.f32 %v454, %v522
        %v524 = vpop.f32.mrb[0].mxu0
        %525 = vmatprep.mubr.f32.mxu0 0.0
        %526 = vmatmul.mubr.f32.gmra.mrb[0].mxu0 %v418
        %v527 = vpop.f32.mrb[0].mxu0
        %v528 = vadd.f32 %v454, %v527
        %v529 = vpop.f32.mrb[0].mxu0
        %530 = vmatprep.mubr.f32.mxu0 0.0
        %531 = vmatmul.mubr.f32.gmra.mrb[0].mxu0 %v419
        %v532 = vpop.f32.mrb[0].mxu0
        %v533 = vadd.f32 %v454, %v532
        %v534 = vpop.f32.mrb[0].mxu0
        %535 = vmatprep.mubr.f32.mxu0 0.0
        %536 = vmatmul.mubr.f32.gmra.mrb[0].mxu0 %v420
        %v537 = vpop.f32.mrb[0].mxu0
        %v538 = vadd.f32 %v454, %v537
        %v539 = vpop.f32.mrb[0].mxu0
        %540 = vmatprep.mubr.f32.mxu0 0.0
        %541 = vmatmul.mubr.f32.gmra.mrb[0].mxu0 %v421
        %v542 = vpop.f32.mrb[0].mxu0
        %v543 = vadd.f32 %v454, %v542
        %v544 = vpop.f32.mrb[0].mxu0
        %545 = vmatprep.mubr.f32.mxu0 0.0
        %546 = vmatmul.mubr.f32.gmra.mrb[0].mxu0 %v422
        %v547 = vpop.f32.mrb[0].mxu0
        %v548 = vadd.f32 %v454, %v547
        %v549 = vpop.f32.mrb[0].mxu0
        %550 = vmatprep.mubr.f32.mxu0 0.0
        %551 = vmatmul.mubr.f32.gmra.mrb[0].mxu0 %v423
        %v552 = vpop.f32.mrb[0].mxu0
        %v553 = vadd.f32 %v454, %v552
        %v554 = vpop.f32.mrb[0].mxu0
        %555 = vmatprep.mubr.f32.mxu0 0.0
        %556 = vmatmul.mubr.f32.gmra.mrb[0].mxu0 %v424
        %v557 = vpop.f32.mrb[0].mxu0
        %v558 = vadd.f32 %v454, %v557
        %v559 = vpop.f32.mrb[0].mxu0
        %560 = vmatprep.mubr.f32.mxu0 0.0
        %561 = vmatmul.mubr.f32.gmra.mrb[0].mxu0 %v425
        %v562 = vpop.f32.mrb[0].mxu0
        %v563 = vadd.f32 %v454, %v562
        %v564 = vpop.f32.mrb[0].mxu0
        %565 = vmatprep.mubr.f32.mxu0 0.0
        %566 = vmatmul.mubr.f32.gmra.mrb[0].mxu0 %v426
        %v567 = vpop.f32.mrb[0].mxu0
        %v568 = vadd.f32 %v454, %v567
        %v569 = vpop.f32.mrb[0].mxu0
        %570 = vmatprep.mubr.f32.mxu0 0.0
        %571 = vmatmul.mubr.f32.gmra.mrb[0].mxu0 %v427
        %v572 = vpop.f32.mrb[0].mxu0
        %v573 = vadd.f32 %v454, %v572
        %v574 = vpop.f32.mrb[0].mxu0
        %575 = vmatprep.mubr.f32.mxu0 0.0
        %576 = vmatmul.mubr.f32.gmra.mrb[0].mxu0 %v428
        %v577 = vpop.f32.mrb[0].mxu0
        %v578 = vadd.f32 %v454, %v577
        %v579 = vpop.f32.mrb[0].mxu0
        %580 = vmatprep.mubr.f32.mxu0 0.0
        %581 = vmatmul.mubr.f32.gmra.mrb[0].mxu0 %v429
        %v582 = vpop.f32.mrb[0].mxu0
        %v583 = vadd.f32 %v454, %v582
        %v584 = vpop.f32.mrb[0].mxu0
        %585 = vmatprep.mubr.f32.mxu0 0.0
        %586 = vmatmul.mubr.f32.gmra.mrb[0].mxu0 %v430
        %v587 = vpop.f32.mrb[0].mxu0
        %v588 = vadd.f32 %v454, %v587
        %v589 = vpop.f32.mrb[0].mxu0
        %590 = vmatprep.mubr.f32.mxu0 0.0
        %591 = vmatmul.mubr.f32.gmra.mrb[0].mxu0 %v431
        %v592 = vpop.f32.mrb[0].mxu0
        %v593 = vadd.f32 %v454, %v592
        %v594 = vpop.f32.mrb[0].mxu0
        %595 = vmatprep.mubr.f32.mxu0 0.0
        %596 = vmatmul.mubr.f32.gmra.mrb[0].mxu0 %v432
        %v597 = vpop.f32.mrb[0].mxu0
        %v598 = vadd.f32 %v454, %v597
        %v599 = vpop.f32.mrb[0].mxu0
        %600 = vdwg.mxu0
        %v601 = vmax.f32 %v523, 0.0
        %v602 = vmax.f32 %v528, 0.0
        %v603 = vmax.f32 %v533, 0.0
        %v604 = vmax.f32 %v538, 0.0
        %v605 = vmax.f32 %v543, 0.0
        %v606 = vmax.f32 %v548, 0.0
        %v607 = vmax.f32 %v553, 0.0
        %v608 = vmax.f32 %v558, 0.0
        %v609 = vmax.f32 %v563, 0.0
        %v610 = vmax.f32 %v568, 0.0
        %v611 = vmax.f32 %v573, 0.0
        %v612 = vmax.f32 %v578, 0.0
        %v613 = vmax.f32 %v583, 0.0
        %v614 = vmax.f32 %v588, 0.0
        %v615 = vmax.f32 %v593, 0.0
        %v616 = vmax.f32 %v598, 0.0
        %617 = vst [vmem:[%s398] sm:$0xff] %v601
        %618 = vst [vmem:[%s398 + $0x8] sm:$0xff] %v602
        %619 = vst [vmem:[%s398 + $0x10] sm:$0xff] %v603
        %620 = vst [vmem:[%s398 + $0x18] sm:$0xff] %v604
        %621 = vst [vmem:[%s398 + $0x20] sm:$0xff] %v605
        %622 = vst [vmem:[%s398 + $0x28] sm:$0xff] %v606
        %623 = vst [vmem:[%s398 + $0x30] sm:$0xff] %v607
        %624 = vst [vmem:[%s398 + $0x38] sm:$0xff] %v608
        %625 = vst [vmem:[%s398 + $0x40] sm:$0xff] %v609
        %626 = vst [vmem:[%s398 + $0x48] sm:$0xff] %v610
        %627 = vst [vmem:[%s398 + $0x50] sm:$0xff] %v611
        %628 = vst [vmem:[%s398 + $0x58] sm:$0xff] %v612
        %629 = vst [vmem:[%s398 + $0x60] sm:$0xff] %v613
        %630 = vst [vmem:[%s398 + $0x68] sm:$0xff] %v614
        %631 = vst [vmem:[%s398 + $0x70] sm:$0xff] %v615
        %632 = vst [vmem:[%s398 + $0x78] sm:$0xff] %v616
        %v633 = vld [vmem:[#allocation7] sm:$0xff]
        %v634 = vld [vmem:[#allocation7 + $0x8] sm:$0xff]
        %v635 = vld [vmem:[#allocation7 + $0x10] sm:$0xff]
        %v636 = vld [vmem:[#allocation7 + $0x18] sm:$0xff]
        %v637 = vld [vmem:[#allocation7 + $0x20] sm:$0xff]
        %v638 = vld [vmem:[#allocation7 + $0x28] sm:$0xff]
        %v639 = vld [vmem:[#allocation7 + $0x30] sm:$0xff]
        %v640 = vld [vmem:[#allocation7 + $0x38] sm:$0xff]
        %v641 = vld [vmem:[#allocation7 + $0x40] sm:$0xff]
        %v642 = vld [vmem:[#allocation7 + $0x48] sm:$0xff]
        %v643 = vld [vmem:[#allocation7 + $0x50] sm:$0xff]
        %v644 = vld [vmem:[#allocation7 + $0x58] sm:$0xff]
        %v645 = vld [vmem:[#allocation7 + $0x60] sm:$0xff]
        %v646 = vld [vmem:[#allocation7 + $0x68] sm:$0xff]
        %v647 = vld [vmem:[#allocation7 + $0x70] sm:$0xff]
        %v648 = vld [vmem:[#allocation7 + $0x78] sm:$0xff]
        %v649 = vld [vmem:[%s4] sm:$0x1]
        %v651 = vlaneseq
        %v652 = vshrl.u32 %v651, 7
        %v653 = vsub.s32 0, %v652
        %v654 = vrot.slane %v649, %v653
        %656 = vmatprep.subr.mxu0 0.0
        %657 = vmatpush1.msra.mxu0 %v633
        %658 = vmatprep.subr.mxu0 0.0
        %659 = vmatpush1.msra.mxu0 %v634
        %660 = vmatprep.subr.mxu0 0.0
        %661 = vmatpush1.msra.mxu0 %v635
        %662 = vmatprep.subr.mxu0 0.0
        %663 = vmatpush1.msra.mxu0 %v636
        %664 = vmatprep.subr.mxu0 0.0
        %665 = vmatpush1.msra.mxu0 %v637
        %666 = vmatprep.subr.mxu0 0.0
        %667 = vmatpush1.msra.mxu0 %v638
        %668 = vmatprep.subr.mxu0 0.0
        %669 = vmatpush1.msra.mxu0 %v639
        %670 = vmatprep.subr.mxu0 0.0
        %671 = vmatpush1.msra.mxu0 %v640
        %672 = vmatprep.subr.mxu0 0.0
        %673 = vmatpush1.msra.mxu0 %v641
        %674 = vmatprep.subr.mxu0 0.0
        %675 = vmatpush1.msra.mxu0 %v642
        %676 = vmatprep.subr.mxu0 0.0
        %677 = vmatpush1.msra.mxu0 %v643
        %678 = vmatprep.subr.mxu0 0.0
        %679 = vmatpush1.msra.mxu0 %v644
        %680 = vmatprep.subr.mxu0 0.0
        %681 = vmatpush1.msra.mxu0 %v645
        %682 = vmatprep.subr.mxu0 0.0
        %683 = vmatpush1.msra.mxu0 %v646
        %684 = vmatprep.subr.mxu0 0.0
        %685 = vmatpush1.msra.mxu0 %v647
        %686 = vmatprep.subr.mxu0 0.0
        %687 = vmatpush1.msra.mxu0 %v648
        %688 = vmatprep.subr.mxu0 0.0
        %689 = vmatpush1.msra.mxu0 0.0
        %690 = vmatprep.subr.mxu0 0.0
        %691 = vmatpush1.msra.mxu0 0.0
        %692 = vmatprep.subr.mxu0 0.0
        %693 = vmatpush1.msra.mxu0 0.0
        %694 = vmatprep.subr.mxu0 0.0
        %695 = vmatpush1.msra.mxu0 0.0
        %696 = vmatprep.subr.mxu0 0.0
        %697 = vmatpush1.msra.mxu0 0.0
        %698 = vmatprep.subr.mxu0 0.0
        %699 = vmatpush1.msra.mxu0 0.0
        %700 = vmatprep.subr.mxu0 0.0
        %701 = vmatpush1.msra.mxu0 0.0
        %702 = vmatprep.subr.mxu0 0.0
        %703 = vmatpush1.msra.mxu0 0.0
        %704 = vmatprep.subr.mxu0 0.0
        %705 = vmatpush1.msra.mxu0 0.0
        %706 = vmatprep.subr.mxu0 0.0
        %707 = vmatpush1.msra.mxu0 0.0
        %708 = vmatprep.subr.mxu0 0.0
        %709 = vmatpush1.msra.mxu0 0.0
        %710 = vmatprep.subr.mxu0 0.0
        %711 = vmatpush1.msra.mxu0 0.0
        %712 = vmatprep.subr.mxu0 0.0
        %713 = vmatpush1.msra.mxu0 0.0
        %714 = vmatprep.subr.mxu0 0.0
        %715 = vmatpush1.msra.mxu0 0.0
        %716 = vmatprep.subr.mxu0 0.0
        %717 = vmatpush1.msra.mxu0 0.0
        %718 = vmatprep.subr.mxu0 0.0
        %719 = vmatpush1.msra.mxu0 0.0
        %720 = vmatprep.mubr.f32.mxu0 0.0
        %721 = vmatmul.mubr.f32.gmra.mrb[0].mxu0 %v601
        %v722 = vpop.f32.mrb[0].mxu0
        %v723 = vadd.f32 %v654, %v722
        %v724 = vpop.f32.mrb[0].mxu0
        %725 = vmatprep.mubr.f32.mxu0 0.0
        %726 = vmatmul.mubr.f32.gmra.mrb[0].mxu0 %v602
        %v727 = vpop.f32.mrb[0].mxu0
        %v728 = vadd.f32 %v654, %v727
        %v729 = vpop.f32.mrb[0].mxu0
        %730 = vmatprep.mubr.f32.mxu0 0.0
        %731 = vmatmul.mubr.f32.gmra.mrb[0].mxu0 %v603
        %v732 = vpop.f32.mrb[0].mxu0
        %v733 = vadd.f32 %v654, %v732
        %v734 = vpop.f32.mrb[0].mxu0
        %735 = vmatprep.mubr.f32.mxu0 0.0
        %736 = vmatmul.mubr.f32.gmra.mrb[0].mxu0 %v604
        %v737 = vpop.f32.mrb[0].mxu0
        %v738 = vadd.f32 %v654, %v737
        %v739 = vpop.f32.mrb[0].mxu0
        %740 = vmatprep.mubr.f32.mxu0 0.0
        %741 = vmatmul.mubr.f32.gmra.mrb[0].mxu0 %v605
        %v742 = vpop.f32.mrb[0].mxu0
        %v743 = vadd.f32 %v654, %v742
        %v744 = vpop.f32.mrb[0].mxu0
        %745 = vmatprep.mubr.f32.mxu0 0.0
        %746 = vmatmul.mubr.f32.gmra.mrb[0].mxu0 %v606
        %v747 = vpop.f32.mrb[0].mxu0
        %v748 = vadd.f32 %v654, %v747
        %v749 = vpop.f32.mrb[0].mxu0
        %750 = vmatprep.mubr.f32.mxu0 0.0
        %751 = vmatmul.mubr.f32.gmra.mrb[0].mxu0 %v607
        %v752 = vpop.f32.mrb[0].mxu0
        %v753 = vadd.f32 %v654, %v752
        %v754 = vpop.f32.mrb[0].mxu0
        %755 = vmatprep.mubr.f32.mxu0 0.0
        %756 = vmatmul.mubr.f32.gmra.mrb[0].mxu0 %v608
        %v757 = vpop.f32.mrb[0].mxu0
        %v758 = vadd.f32 %v654, %v757
        %v759 = vpop.f32.mrb[0].mxu0
        %760 = vmatprep.mubr.f32.mxu0 0.0
        %761 = vmatmul.mubr.f32.gmra.mrb[0].mxu0 %v609
        %v762 = vpop.f32.mrb[0].mxu0
        %v763 = vadd.f32 %v654, %v762
        %v764 = vpop.f32.mrb[0].mxu0
        %765 = vmatprep.mubr.f32.mxu0 0.0
        %766 = vmatmul.mubr.f32.gmra.mrb[0].mxu0 %v610
        %v767 = vpop.f32.mrb[0].mxu0
        %v768 = vadd.f32 %v654, %v767
        %v769 = vpop.f32.mrb[0].mxu0
        %770 = vmatprep.mubr.f32.mxu0 0.0
        %771 = vmatmul.mubr.f32.gmra.mrb[0].mxu0 %v611
        %v772 = vpop.f32.mrb[0].mxu0
        %v773 = vadd.f32 %v654, %v772
        %v774 = vpop.f32.mrb[0].mxu0
        %775 = vmatprep.mubr.f32.mxu0 0.0
        %776 = vmatmul.mubr.f32.gmra.mrb[0].mxu0 %v612
        %v777 = vpop.f32.mrb[0].mxu0
        %v778 = vadd.f32 %v654, %v777
        %v779 = vpop.f32.mrb[0].mxu0
        %780 = vmatprep.mubr.f32.mxu0 0.0
        %781 = vmatmul.mubr.f32.gmra.mrb[0].mxu0 %v613
        %v782 = vpop.f32.mrb[0].mxu0
        %v783 = vadd.f32 %v654, %v782
        %v784 = vpop.f32.mrb[0].mxu0
        %785 = vmatprep.mubr.f32.mxu0 0.0
        %786 = vmatmul.mubr.f32.gmra.mrb[0].mxu0 %v614
        %v787 = vpop.f32.mrb[0].mxu0
        %v788 = vadd.f32 %v654, %v787
        %v789 = vpop.f32.mrb[0].mxu0
        %790 = vmatprep.mubr.f32.mxu0 0.0
        %791 = vmatmul.mubr.f32.gmra.mrb[0].mxu0 %v615
        %v792 = vpop.f32.mrb[0].mxu0
        %v793 = vadd.f32 %v654, %v792
        %v794 = vpop.f32.mrb[0].mxu0
        %795 = vmatprep.mubr.f32.mxu0 0.0
        %796 = vmatmul.mubr.f32.gmra.mrb[0].mxu0 %v616
        %v797 = vpop.f32.mrb[0].mxu0
        %v798 = vadd.f32 %v654, %v797
        %v799 = vpop.f32.mrb[0].mxu0
        %800 = vdwg.mxu0
        %v801 = vtanh.pop %v723
        %v802 = vtanh.pop %v728
        %v803 = vtanh.pop %v733
        %v804 = vtanh.pop %v738
        %v805 = vtanh.pop %v743
        %v806 = vtanh.pop %v748
        %v807 = vtanh.pop %v753
        %v808 = vtanh.pop %v758
        %v809 = vtanh.pop %v763
        %v810 = vtanh.pop %v768
        %v811 = vtanh.pop %v773
        %v812 = vtanh.pop %v778
        %v813 = vtanh.pop %v783
        %v814 = vtanh.pop %v788
        %v815 = vtanh.pop %v793
        %v816 = vtanh.pop %v798
        %817 = vst [vmem:[%s405] sm:$0xff] %v801
        %818 = vst [vmem:[%s405 + $0x8] sm:$0xff] %v802
        %819 = vst [vmem:[%s405 + $0x10] sm:$0xff] %v803
        %820 = vst [vmem:[%s405 + $0x18] sm:$0xff] %v804
        %821 = vst [vmem:[%s405 + $0x20] sm:$0xff] %v805
        %822 = vst [vmem:[%s405 + $0x28] sm:$0xff] %v806
        %823 = vst [vmem:[%s405 + $0x30] sm:$0xff] %v807
        %824 = vst [vmem:[%s405 + $0x38] sm:$0xff] %v808
        %825 = vst [vmem:[%s405 + $0x40] sm:$0xff] %v809
        %826 = vst [vmem:[%s405 + $0x48] sm:$0xff] %v810
        %827 = vst [vmem:[%s405 + $0x50] sm:$0xff] %v811
        %828 = vst [vmem:[%s405 + $0x58] sm:$0xff] %v812
        %829 = vst [vmem:[%s405 + $0x60] sm:$0xff] %v813
        %830 = vst [vmem:[%s405 + $0x68] sm:$0xff] %v814
        %831 = vst [vmem:[%s405 + $0x70] sm:$0xff] %v815
        %832 = vst [vmem:[%s405 + $0x78] sm:$0xff] %v816
        %v833 = vld [vmem:[#allocation8] sm:$0xff]
        %v834 = vld [vmem:[#allocation8 + $0x8] sm:$0xff]
        %v835 = vld [vmem:[#allocation8 + $0x10] sm:$0xff]
        %v836 = vld [vmem:[#allocation8 + $0x18] sm:$0xff]
        %v837 = vld [vmem:[#allocation8 + $0x20] sm:$0xff]
        %v838 = vld [vmem:[#allocation8 + $0x28] sm:$0xff]
        %v839 = vld [vmem:[#allocation8 + $0x30] sm:$0xff]
        %v840 = vld [vmem:[#allocation8 + $0x38] sm:$0xff]
        %v841 = vld [vmem:[#allocation8 + $0x40] sm:$0xff]
        %v842 = vld [vmem:[#allocation8 + $0x48] sm:$0xff]
        %v843 = vld [vmem:[#allocation8 + $0x50] sm:$0xff]
        %v844 = vld [vmem:[#allocation8 + $0x58] sm:$0xff]
        %v845 = vld [vmem:[#allocation8 + $0x60] sm:$0xff]
        %v846 = vld [vmem:[#allocation8 + $0x68] sm:$0xff]
        %v847 = vld [vmem:[#allocation8 + $0x70] sm:$0xff]
        %v848 = vld [vmem:[#allocation8 + $0x78] sm:$0xff]
        %v849 = vld [vmem:[%s6] sm:$0x1]
        %v851 = vlaneseq
        %v852 = vshrl.u32 %v851, 7
        %v853 = vsub.s32 0, %v852
        %v854 = vrot.slane %v849, %v853
        %856 = vmatprep.subr.mxu0 0.0
        %857 = vmatpush1.msra.mxu0 %v833
        %858 = vmatprep.subr.mxu0 0.0
        %859 = vmatpush1.msra.mxu0 %v834
        %860 = vmatprep.subr.mxu0 0.0
        %861 = vmatpush1.msra.mxu0 %v835
        %862 = vmatprep.subr.mxu0 0.0
        %863 = vmatpush1.msra.mxu0 %v836
        %864 = vmatprep.subr.mxu0 0.0
        %865 = vmatpush1.msra.mxu0 %v837
        %866 = vmatprep.subr.mxu0 0.0
        %867 = vmatpush1.msra.mxu0 %v838
        %868 = vmatprep.subr.mxu0 0.0
        %869 = vmatpush1.msra.mxu0 %v839
        %870 = vmatprep.subr.mxu0 0.0
        %871 = vmatpush1.msra.mxu0 %v840
        %872 = vmatprep.subr.mxu0 0.0
        %873 = vmatpush1.msra.mxu0 %v841
        %874 = vmatprep.subr.mxu0 0.0
        %875 = vmatpush1.msra.mxu0 %v842
        %876 = vmatprep.subr.mxu0 0.0
        %877 = vmatpush1.msra.mxu0 %v843
        %878 = vmatprep.subr.mxu0 0.0
        %879 = vmatpush1.msra.mxu0 %v844
        %880 = vmatprep.subr.mxu0 0.0
        %881 = vmatpush1.msra.mxu0 %v845
        %882 = vmatprep.subr.mxu0 0.0
        %883 = vmatpush1.msra.mxu0 %v846
        %884 = vmatprep.subr.mxu0 0.0
        %885 = vmatpush1.msra.mxu0 %v847
        %886 = vmatprep.subr.mxu0 0.0
        %887 = vmatpush1.msra.mxu0 %v848
        %888 = vmatprep.subr.mxu0 0.0
        %889 = vmatpush1.msra.mxu0 0.0
        %890 = vmatprep.subr.mxu0 0.0
        %891 = vmatpush1.msra.mxu0 0.0
        %892 = vmatprep.subr.mxu0 0.0
        %893 = vmatpush1.msra.mxu0 0.0
        %894 = vmatprep.subr.mxu0 0.0
        %895 = vmatpush1.msra.mxu0 0.0
        %896 = vmatprep.subr.mxu0 0.0
        %897 = vmatpush1.msra.mxu0 0.0
        %898 = vmatprep.subr.mxu0 0.0
        %899 = vmatpush1.msra.mxu0 0.0
        %900 = vmatprep.subr.mxu0 0.0
        %901 = vmatpush1.msra.mxu0 0.0
        %902 = vmatprep.subr.mxu0 0.0
        %903 = vmatpush1.msra.mxu0 0.0
        %904 = vmatprep.subr.mxu0 0.0
        %905 = vmatpush1.msra.mxu0 0.0
        %906 = vmatprep.subr.mxu0 0.0
        %907 = vmatpush1.msra.mxu0 0.0
        %908 = vmatprep.subr.mxu0 0.0
        %909 = vmatpush1.msra.mxu0 0.0
        %910 = vmatprep.subr.mxu0 0.0
        %911 = vmatpush1.msra.mxu0 0.0
        %912 = vmatprep.subr.mxu0 0.0
        %913 = vmatpush1.msra.mxu0 0.0
        %914 = vmatprep.subr.mxu0 0.0
        %915 = vmatpush1.msra.mxu0 0.0
        %916 = vmatprep.subr.mxu0 0.0
        %917 = vmatpush1.msra.mxu0 0.0
        %918 = vmatprep.subr.mxu0 0.0
        %919 = vmatpush1.msra.mxu0 0.0
        %920 = vmatprep.mubr.f32.mxu0 0.0
        %921 = vmatmul.mubr.f32.gmra.mrb[0].mxu0 %v801
        %v922 = vpop.f32.mrb[0].mxu0
        %v923 = vadd.f32 %v854, %v922
        %v924 = vpop.f32.mrb[0].mxu0
        %925 = vmatprep.mubr.f32.mxu0 0.0
        %926 = vmatmul.mubr.f32.gmra.mrb[0].mxu0 %v802
        %v927 = vpop.f32.mrb[0].mxu0
        %v928 = vadd.f32 %v854, %v927
        %v929 = vpop.f32.mrb[0].mxu0
        %930 = vmatprep.mubr.f32.mxu0 0.0
        %931 = vmatmul.mubr.f32.gmra.mrb[0].mxu0 %v803
        %v932 = vpop.f32.mrb[0].mxu0
        %v933 = vadd.f32 %v854, %v932
        %v934 = vpop.f32.mrb[0].mxu0
        %935 = vmatprep.mubr.f32.mxu0 0.0
        %936 = vmatmul.mubr.f32.gmra.mrb[0].mxu0 %v804
        %v937 = vpop.f32.mrb[0].mxu0
        %v938 = vadd.f32 %v854, %v937
        %v939 = vpop.f32.mrb[0].mxu0
        %940 = vmatprep.mubr.f32.mxu0 0.0
        %941 = vmatmul.mubr.f32.gmra.mrb[0].mxu0 %v805
        %v942 = vpop.f32.mrb[0].mxu0
        %v943 = vadd.f32 %v854, %v942
        %v944 = vpop.f32.mrb[0].mxu0
        %945 = vmatprep.mubr.f32.mxu0 0.0
        %946 = vmatmul.mubr.f32.gmra.mrb[0].mxu0 %v806
        %v947 = vpop.f32.mrb[0].mxu0
        %v948 = vadd.f32 %v854, %v947
        %v949 = vpop.f32.mrb[0].mxu0
        %950 = vmatprep.mubr.f32.mxu0 0.0
        %951 = vmatmul.mubr.f32.gmra.mrb[0].mxu0 %v807
        %v952 = vpop.f32.mrb[0].mxu0
        %v953 = vadd.f32 %v854, %v952
        %v954 = vpop.f32.mrb[0].mxu0
        %955 = vmatprep.mubr.f32.mxu0 0.0
        %956 = vmatmul.mubr.f32.gmra.mrb[0].mxu0 %v808
        %v957 = vpop.f32.mrb[0].mxu0
        %v958 = vadd.f32 %v854, %v957
        %v959 = vpop.f32.mrb[0].mxu0
        %960 = vmatprep.mubr.f32.mxu0 0.0
        %961 = vmatmul.mubr.f32.gmra.mrb[0].mxu0 %v809
        %v962 = vpop.f32.mrb[0].mxu0
        %v963 = vadd.f32 %v854, %v962
        %v964 = vpop.f32.mrb[0].mxu0
        %965 = vmatprep.mubr.f32.mxu0 0.0
        %966 = vmatmul.mubr.f32.gmra.mrb[0].mxu0 %v810
        %v967 = vpop.f32.mrb[0].mxu0
        %v968 = vadd.f32 %v854, %v967
        %v969 = vpop.f32.mrb[0].mxu0
        %970 = vmatprep.mubr.f32.mxu0 0.0
        %971 = vmatmul.mubr.f32.gmra.mrb[0].mxu0 %v811
        %v972 = vpop.f32.mrb[0].mxu0
        %v973 = vadd.f32 %v854, %v972
        %v974 = vpop.f32.mrb[0].mxu0
        %975 = vmatprep.mubr.f32.mxu0 0.0
        %976 = vmatmul.mubr.f32.gmra.mrb[0].mxu0 %v812
        %v977 = vpop.f32.mrb[0].mxu0
        %v978 = vadd.f32 %v854, %v977
        %v979 = vpop.f32.mrb[0].mxu0
        %980 = vmatprep.mubr.f32.mxu0 0.0
        %981 = vmatmul.mubr.f32.gmra.mrb[0].mxu0 %v813
        %v982 = vpop.f32.mrb[0].mxu0
        %v983 = vadd.f32 %v854, %v982
        %v984 = vpop.f32.mrb[0].mxu0
        %985 = vmatprep.mubr.f32.mxu0 0.0
        %986 = vmatmul.mubr.f32.gmra.mrb[0].mxu0 %v814
        %v987 = vpop.f32.mrb[0].mxu0
        %v988 = vadd.f32 %v854, %v987
        %v989 = vpop.f32.mrb[0].mxu0
        %990 = vmatprep.mubr.f32.mxu0 0.0
        %991 = vmatmul.mubr.f32.gmra.mrb[0].mxu0 %v815
        %v992 = vpop.f32.mrb[0].mxu0
        %v993 = vadd.f32 %v854, %v992
        %v994 = vpop.f32.mrb[0].mxu0
        %995 = vmatprep.mubr.f32.mxu0 0.0
        %996 = vmatmul.mubr.f32.gmra.mrb[0].mxu0 %v816
        %v997 = vpop.f32.mrb[0].mxu0
        %v998 = vadd.f32 %v854, %v997
        %v999 = vpop.f32.mrb[0].mxu0
        %1000 = vdwg.mxu0
        %1001 = vst [vmem:[%s412] sm:$0xff] %v923
        %1002 = vst [vmem:[%s412 + $0x8] sm:$0xff] %v928
        %1003 = vst [vmem:[%s412 + $0x10] sm:$0xff] %v933
        %1004 = vst [vmem:[%s412 + $0x18] sm:$0xff] %v938
        %1005 = vst [vmem:[%s412 + $0x20] sm:$0xff] %v943
        %1006 = vst [vmem:[%s412 + $0x28] sm:$0xff] %v948
        %1007 = vst [vmem:[%s412 + $0x30] sm:$0xff] %v953
        %1008 = vst [vmem:[%s412 + $0x38] sm:$0xff] %v958
        %1009 = vst [vmem:[%s412 + $0x40] sm:$0xff] %v963
        %1010 = vst [vmem:[%s412 + $0x48] sm:$0xff] %v968
        %1011 = vst [vmem:[%s412 + $0x50] sm:$0xff] %v973
        %1012 = vst [vmem:[%s412 + $0x58] sm:$0xff] %v978
        %1013 = vst [vmem:[%s412 + $0x60] sm:$0xff] %v983
        %1014 = vst [vmem:[%s412 + $0x68] sm:$0xff] %v988
        %1015 = vst [vmem:[%s412 + $0x70] sm:$0xff] %v993
        %1016 = vst [vmem:[%s412 + $0x78] sm:$0xff] %v998
        %s1017 = sand.u32 %s192, 1
        %s1018 = scalar_lea.sflag [#allocation4], %s1017
        %s1019 = sand.u32 %s192, 1
        %s1020 = smul.addr %s1019, 128
        %s1021 = scalar_lea.vmem [#allocation10], %s1020
        %s1022 = sand.u32 %s32, 1
        %s1023 = scalar_lea.sflag [#allocation12], %s1022
        %s1024 = sand.u32 %s218, 1
        %s1025 = smul.addr %s1024, 128
        %s1026 = scalar_lea.vmem [#allocation11], %s1025
        %s1027 = sand.u32 %s32, 1
        %s1028 = scalar_lea.sflag [#allocation12], %s1027
        %s1029 = sand.u32 %s244, 1
        %s1030 = smul.addr %s1029, 128
        %s1031 = scalar_lea.vmem [#allocation13], %s1030
        // Predicated region
        $region65: #{tpu_custom_call.1} parent=47 // pred_check
          %p1032 = pneg %p202
        $region66: #{tpu_custom_call.1} parent=47 // pred_check_branch
          %1034 = sbr.rel (%p1032) target = $region68
        $region67: #{tpu_custom_call.1} parent=47 // pred_region
          %s1035 = smul.u32 16, %s32
          %s1037 = ssub.s32 2048, 2048
          %1038 = vsyncadd %s1018, %s1037
          %s1039 = smul.addr %s1035, 128
          %s1040 = scalar_lea.hbm %s7, %s1039
          %s1041 = sshll.u32 %s1021, 4
          %s1042 = int_to_ptr.vmem [resolvable:$true] %s1041
          %1047 = dma.vmem_to_hbm [thread:$0]  %s1042, 2048, %s1040, %s1018, 128, 128, 8
        $region68: #{tpu_custom_call.1} parent=47 // pred_fallthru
          _
        // Predicated region
        $region69: #{tpu_custom_call.1} parent=47 // pred_check
          %p1048 = pneg %p228
        $region70: #{tpu_custom_call.1} parent=47 // pred_check_branch
          %1050 = sbr.rel (%p1048) target = $region72
        $region71: #{tpu_custom_call.1} parent=47 // pred_region
          %s1051 = smul.u32 16, %s32
          %s1053 = ssub.s32 2048, 2048
          %1054 = vsyncadd %s1023, %s1053
          %s1055 = smul.addr %s1051, 128
          %s1056 = scalar_lea.hbm %s8, %s1055
          %s1057 = sshll.u32 %s1026, 4
          %s1058 = int_to_ptr.vmem [resolvable:$true] %s1057
          %1063 = dma.vmem_to_hbm [thread:$0]  %s1058, 2048, %s1056, %s1023, 128, 128, 8
        $region72: #{tpu_custom_call.1} parent=47 // pred_fallthru
          _
        // Predicated region
        $region73: #{tpu_custom_call.1} parent=47 // pred_check
          %p1064 = pneg %p254
        $region74: #{tpu_custom_call.1} parent=47 // pred_check_branch
          %1066 = sbr.rel (%p1064) target = $region76
        $region75: #{tpu_custom_call.1} parent=47 // pred_region
          %s1067 = smul.u32 16, %s32
          %s1069 = ssub.s32 2048, 2048
          %1070 = vsyncadd %s1028, %s1069
          %s1071 = smul.addr %s1067, 128
          %s1072 = scalar_lea.hbm %s9, %s1071
          %s1073 = sshll.u32 %s1031, 4
          %s1074 = int_to_ptr.vmem [resolvable:$true] %s1073
          %1079 = dma.vmem_to_hbm [thread:$0]  %s1074, 2048, %s1072, %s1028, 128, 128, 8
        $region76: #{tpu_custom_call.1} parent=47 // pred_fallthru
          _
      $region48: #{tpu_custom_call.1} parent=5 // pred_fallthru
        _
      %p1080 = scmp.le.s32.totalorder 2, %s27
      // Predicated region
      $region77: #{tpu_custom_call.1} parent=5 // pred_check
        %p1081 = pneg %p1080
      $region78: #{tpu_custom_call.1} parent=5 // pred_check_branch
        %1083 = sbr.rel (%p1081) target = $region80
      $region79: #{tpu_custom_call.1} parent=5 // pred_region
        %s1084 = ssub.s32 %s27, 2
        // Predicated region
        $region81: #{tpu_custom_call.1} parent=79 // pred_check
          %p1085 = pneg %p208
        $region82: #{tpu_custom_call.1} parent=79 // pred_check_branch
          %1087 = sbr.rel (%p1085) target = $region84
        $region83: #{tpu_custom_call.1} parent=79 // pred_region
          %s1088 = sand.u32 %s193, 1
          %s1089 = scalar_lea.sflag [#allocation4], %s1088
          %s1090 = sand.u32 %s193, 1
          %s1091 = smul.addr %s1090, 128
          %s1092 = scalar_lea.vmem [#allocation10], %s1091
          %1093 = dma.done %s1089, 2048
        $region84: #{tpu_custom_call.1} parent=79 // pred_fallthru
          _
        // Predicated region
        $region85: #{tpu_custom_call.1} parent=79 // pred_check
          %p1094 = pneg %p234
        $region86: #{tpu_custom_call.1} parent=79 // pred_check_branch
          %1096 = sbr.rel (%p1094) target = $region88
        $region87: #{tpu_custom_call.1} parent=79 // pred_region
          %s1097 = sand.u32 %s33, 1
          %s1098 = scalar_lea.sflag [#allocation12], %s1097
          %s1099 = sand.u32 %s219, 1
          %s1100 = smul.addr %s1099, 128
          %s1101 = scalar_lea.vmem [#allocation11], %s1100
          %1102 = dma.done %s1098, 2048
        $region88: #{tpu_custom_call.1} parent=79 // pred_fallthru
          _
        // Predicated region
        $region89: #{tpu_custom_call.1} parent=79 // pred_check
          %p1103 = pneg %p260
        $region90: #{tpu_custom_call.1} parent=79 // pred_check_branch
          %1105 = sbr.rel (%p1103) target = $region92
        $region91: #{tpu_custom_call.1} parent=79 // pred_region
          %s1106 = sand.u32 %s33, 1
          %s1107 = scalar_lea.sflag [#allocation12], %s1106
          %s1108 = sand.u32 %s245, 1
          %s1109 = smul.addr %s1108, 128
          %s1110 = scalar_lea.vmem [#allocation13], %s1109
          %1111 = dma.done %s1107, 2048
        $region92: #{tpu_custom_call.1} parent=79 // pred_fallthru
          _
      $region80: #{tpu_custom_call.1} parent=5 // pred_fallthru
        _
    $region6: #{tpu_custom_call.1} parent=1 // loop_footer
      %s31 = sadd.s32 1, %s27
    $region7: #{tpu_custom_call.1} parent=1 // loop_footer_branch
      %26 = sbr.rel target = $region3
    $region8: #{tpu_custom_call.1} parent=1 // loop_exit
      _
    %1112 = vsyncpa [#allocation3], 1
    %s1113 = scalar_lea.sflag [#allocation3], 1
    %1114 = vsyncpa %s1113, 1
    %1115 = vsyncpa [#allocation6], 1
    %1116 = vsyncpa [#allocation9], 1
    %1117 = vsyncpa [#allocation4], 1
    %s1118 = scalar_lea.sflag [#allocation4], 1
    %1119 = vsyncpa %s1118, 1
    %1120 = vsyncpa [#allocation12], 1
    %s1121 = scalar_lea.sflag [#allocation12], 1
    %1122 = vsyncpa %s1121, 1

</llo_original>
